<compile_context>
chip_gen: v7x
topology: tpu7x:2x2x1
jax: 0.10.0
libtpu: 0.0.40
codegen_flags: <defaults>
</compile_context>

<pallas_src>
import jax
import jax.numpy as jnp
from jax.experimental import pallas as pl
from jax.experimental.pallas import tpu as pltpu  # noqa: F401  (TPU backend)

_LANE = 128  # TPU lane width; output padded to a multiple of this.


def _siamese_embed_kernel(x_ref, w1_ref, b1_ref, w2_ref, b2_ref, out_ref):
    # x_ref  : (M, D_in)      bf16, M = 2N (x1 and x2 stacked row-wise)
    # w1_ref : (D_in, HID)    bf16 shared first-layer weight
    # b1_ref : (1, HID)       f32  first-layer bias
    # w2_ref : (HID, EMB_PAD) bf16 second-layer weight, zero-padded to 128 lanes
    # b2_ref : (1, EMB_PAD)   f32  second-layer bias, zero-padded
    # out_ref: (M, EMB_PAD)   f32  lane-dense output slab (unmasked stores)
    h = jnp.dot(x_ref[...], w1_ref[...], preferred_element_type=jnp.float32)
    h = jnp.maximum(h + b1_ref[...], 0.0)  # ReLU
    out = jnp.dot(h.astype(w2_ref.dtype), w2_ref[...],
                  preferred_element_type=jnp.float32)
    out_ref[...] = out + b2_ref[...]


def _embed_stacked(x_bf16, w1_bf16, b1, w2_pad_bf16, b2_pad):
    """One pallas_call over the full stacked batch (weights resident once)."""
    m = x_bf16.shape[0]
    emb_pad = w2_pad_bf16.shape[1]
    # Single grid step; block == full array, so the (8,128) rule is trivially
    # satisfied and everything lives in VMEM for the whole kernel.
    return pl.pallas_call(
        _siamese_embed_kernel,
        out_shape=jax.ShapeDtypeStruct((m, emb_pad), jnp.float32),
        in_specs=[
            pl.BlockSpec(x_bf16.shape, lambda: (0, 0)),
            pl.BlockSpec(w1_bf16.shape, lambda: (0, 0)),
            pl.BlockSpec(b1.shape, lambda: (0, 0)),
            pl.BlockSpec(w2_pad_bf16.shape, lambda: (0, 0)),
            pl.BlockSpec(b2_pad.shape, lambda: (0, 0)),
        ],
        out_specs=pl.BlockSpec((m, emb_pad), lambda: (0, 0)),
    )(x_bf16, w1_bf16, b1, w2_pad_bf16, b2_pad)


def _prepare_params(params):
    """Cast weights to bf16 and zero-pad the output layer to 128 lanes."""
    w1, b1, w2, b2 = params
    hid, emb = w2.shape
    emb_pad = max(_LANE, ((emb + _LANE - 1) // _LANE) * _LANE)
    w2_pad = jnp.zeros((hid, emb_pad), jnp.float32).at[:, :emb].set(w2)
    b2_pad = jnp.zeros((1, emb_pad), jnp.float32).at[:, :emb].set(b2)
    return (w1.astype(jnp.bfloat16),
            b1.astype(jnp.float32),
            w2_pad.astype(jnp.bfloat16),
            b2_pad,
            emb)


def siamese_forward(x1, x2, params):
    """SiameseNetwork.forward: shared embedding_net applied to both inputs,
    fused into a single kernel call."""
    w1b, b1, w2p, b2p, emb = _prepare_params(params)
    n = x1.shape[0]
    # Flatten NCHW -> (N, C*H*W) row-major (== torch.flatten(x, 1)) and stack
    # the pair into one (2N, D_in) batch in a single fused op.
    x = jnp.concatenate([x1.reshape(n, -1), x2.reshape(n, -1)], axis=0)
    x = x.astype(jnp.bfloat16)
    out = _embed_stacked(x, w1b, b1, w2p, b2p)  # (2N, EMB_PAD) f32
    out1 = out[:n, :emb]
    out2 = out[n:, :emb]
    return out1, out2


def get_embedding(x, params):
    """SiameseNetwork.get_embedding."""
    w1b, b1, w2p, b2p, emb = _prepare_params(params)
    xf = x.reshape(x.shape[0], -1).astype(jnp.bfloat16)
    out = _embed_stacked(xf, w1b, b1, w2p, b2p)
    return out[:, :emb]


def init_params(c, h, w, hidden, emb_dim):
    """Deterministic synthetic parameters for the embedding net (f32 logical)."""
    d_in = c * h * w
    kw1, kb1, kw2, kb2 = jax.random.split(jax.random.PRNGKey(42), 4)
    w1 = jax.random.normal(kw1, (d_in, hidden), jnp.float32) * (1.0 / jnp.sqrt(d_in))
    b1 = jax.random.normal(kb1, (1, hidden), jnp.float32) * 0.01
    w2 = jax.random.normal(kw2, (hidden, emb_dim), jnp.float32) * (1.0 / jnp.sqrt(hidden))
    b2 = jax.random.normal(kb2, (1, emb_dim), jnp.float32) * 0.01
    return w1, b1, w2, b2


if __name__ == "__main__":
    # Small shapes: batch=2, channels=4, spatial=16x16, hidden=64, embedding=32
    N, C, H, W = 2, 4, 16, 16
    HID, EMB = 64, 32

    k1, k2 = jax.random.split(jax.random.PRNGKey(0), 2)
    x1 = jax.random.normal(k1, (N, C, H, W), jnp.float32)
    x2 = jax.random.normal(k2, (N, C, H, W), jnp.float32)

    params = init_params(C, H, W, HID, EMB)

    fwd = jax.jit(siamese_forward)
    out1, out2 = fwd(x1, x2, params)
    jax.block_until_ready((out1, out2))

    # Reference: same bf16 weights/activations with f32 accumulation, so the
    # comparison isolates kernel correctness rather than quantization error.
    def ref_embed(x):
        w1, b1, w2, b2 = params
        xf = x.reshape(x.shape[0], -1).astype(jnp.bfloat16)
        h = jnp.dot(xf, w1.astype(jnp.bfloat16),
                    preferred_element_type=jnp.float32) + b1
        h = jnp.maximum(h, 0.0)
        return jnp.dot(h.astype(jnp.bfloat16), w2.astype(jnp.bfloat16),
                       preferred_element_type=jnp.float32) + b2

    assert out1.shape == (N, EMB) and out2.shape == (N, EMB)
    assert jnp.allclose(out1, ref_embed(x1), atol=1e-2, rtol=1e-2)
    assert jnp.allclose(out2, ref_embed(x2), atol=1e-2, rtol=1e-2)

    emb_single = jax.block_until_ready(get_embedding(x1, params))
    assert emb_single.shape == (N, EMB)
    assert jnp.allclose(emb_single, ref_embed(x1), atol=1e-2, rtol=1e-2)

    print("KERNEL_OK")
</pallas_src>

<mosaic_0001>
module attributes {stable_mosaic.version = 11 : i64} {
  func.func @_siamese_embed_kernel(%arg0: memref<4x1024xbf16, #tpu.memory_space<vmem>>, %arg1: memref<1024x64xbf16, #tpu.memory_space<vmem>>, %arg2: memref<1x64xf32, #tpu.memory_space<vmem>>, %arg3: memref<64x128xbf16, #tpu.memory_space<vmem>>, %arg4: memref<1x128xf32, #tpu.memory_space<vmem>>, %arg5: memref<4x128xf32, #tpu.memory_space<vmem>>) attributes {dimension_semantics = [], scalar_prefetch = 0 : i64, scratch_operands = 0 : i64, tpu.core_type = #tpu.core_type<tc>} {
    %c0 = arith.constant 0 : index
    %c0_0 = arith.constant 0 : index
    %0 = vector.load %arg0[%c0, %c0_0] : memref<4x1024xbf16, #tpu.memory_space<vmem>>, vector<4x1024xbf16>
    %c0_1 = arith.constant 0 : index
    %c0_2 = arith.constant 0 : index
    %1 = vector.load %arg1[%c0_1, %c0_2] : memref<1024x64xbf16, #tpu.memory_space<vmem>>, vector<1024x64xbf16>
    %cst = arith.constant dense<0.000000e+00> : vector<4x64xf32>
    %2 = tpu.matmul %0, %1, %cst {dimension_numbers = #tpu.dot_dimension_numbers<[1], [0], [0], [1], [0, 0, 1, 1], [], []>} : vector<4x1024xbf16>, vector<1024x64xbf16>, vector<4x64xf32> -> vector<4x64xf32>
    %c0_3 = arith.constant 0 : index
    %c0_4 = arith.constant 0 : index
    %3 = vector.load %arg2[%c0_3, %c0_4] : memref<1x64xf32, #tpu.memory_space<vmem>>, vector<1x64xf32>
    %4 = vector.broadcast %3 : vector<1x64xf32> to vector<4x64xf32>
    %5 = arith.addf %2, %4 : vector<4x64xf32>
    %cst_5 = arith.constant 0.000000e+00 : f32
    %6 = vector.broadcast %cst_5 : f32 to vector<4x64xf32>
    %7 = arith.maximumf %5, %6 : vector<4x64xf32>
    %8 = arith.truncf %7 : vector<4x64xf32> to vector<4x64xbf16>
    %c0_6 = arith.constant 0 : index
    %c0_7 = arith.constant 0 : index
    %9 = vector.load %arg3[%c0_6, %c0_7] : memref<64x128xbf16, #tpu.memory_space<vmem>>, vector<64x128xbf16>
    %cst_8 = arith.constant dense<0.000000e+00> : vector<4x128xf32>
    %10 = tpu.matmul %8, %9, %cst_8 {dimension_numbers = #tpu.dot_dimension_numbers<[1], [0], [0], [1], [0, 0, 1, 1], [], []>} : vector<4x64xbf16>, vector<64x128xbf16>, vector<4x128xf32> -> vector<4x128xf32>
    %c0_9 = arith.constant 0 : index
    %c0_10 = arith.constant 0 : index
    %11 = vector.load %arg4[%c0_9, %c0_10] : memref<1x128xf32, #tpu.memory_space<vmem>>, vector<1x128xf32>
    %12 = vector.broadcast %11 : vector<1x128xf32> to vector<4x128xf32>
    %13 = arith.addf %10, %12 : vector<4x128xf32>
    %c0_11 = arith.constant 0 : index
    %c0_12 = arith.constant 0 : index
    %14 = vector.load %arg5[%c0_11, %c0_12] : memref<4x128xf32, #tpu.memory_space<vmem>>, vector<4x128xf32>
    tpu.vector_store %arg5[%c0_11, %c0_12], %13 {strides = array<i32>} : memref<4x128xf32, #tpu.memory_space<vmem>>, vector<4x128xf32>,
    return
  }
}

</mosaic_0001>

<llo_original>
// kernel: siamese_forward.1
$region0: #{siamese_forward.1}
  #allocation0 [shape = 'u32[]', space=smem, size = 0x4, offset = 0x4, fixed_abs, tag = 'smem constant byte address 0x4 - core index']
  #allocation1 [shape = 'u32[144,128]{1,0:T(1,128)}', space=vmem, size = 0x12000, scoped, tag = 'internal scratch']
  %s0 = inlined_call_operand.vmem [shape: bf16[4,1024], index: 0, kind: input, shape index: {}]
  %s1 = inlined_call_operand.vmem [shape: bf16[1024,64], index: 1, kind: input, shape index: {}]
  %s2 = inlined_call_operand.vmem [shape: f32[1,64], index: 2, kind: input, shape index: {}]
  %s3 = inlined_call_operand.vmem [shape: bf16[64,128], index: 3, kind: input, shape index: {}]
  %s4 = inlined_call_operand.vmem [shape: f32[1,128], index: 4, kind: input, shape index: {}]
  %s5 = inlined_call_operand.vmem [shape: f32[4,128], index: 5, kind: output, shape index: {}]
  %s6 = sld [smem:[#allocation0]]
  $region30: #{siamese_forward.1} parent=0
    _
  %s8 = ssub.s32 1, %s6
  %s9 = scalar_select 0, %s8, %s6
  // Predicated region
  $region2: #{siamese_forward.1} parent=0 // pred_check
    _
  $region3: #{siamese_forward.1} parent=0 // pred_check_branch
    %11 = sbr.rel (0) target = $region5
  $region4: #{siamese_forward.1} parent=0 // pred_region
    _
  $region5: #{siamese_forward.1} parent=0 // pred_fallthru
    _
  // Predicated region
  $region6: #{siamese_forward.1} parent=0 // pred_check
    _
  $region7: #{siamese_forward.1} parent=0 // pred_check_branch
    %13 = sbr.rel (0) target = $region9
  $region8: #{siamese_forward.1} parent=0 // pred_region
    _
  $region9: #{siamese_forward.1} parent=0 // pred_fallthru
    _
  // Predicated region
  $region10: #{siamese_forward.1} parent=0 // pred_check
    _
  $region11: #{siamese_forward.1} parent=0 // pred_check_branch
    %15 = sbr.rel (0) target = $region13
  $region12: #{siamese_forward.1} parent=0 // pred_region
    _
  $region13: #{siamese_forward.1} parent=0 // pred_fallthru
    _
  // Predicated region
  $region14: #{siamese_forward.1} parent=0 // pred_check
    _
  $region15: #{siamese_forward.1} parent=0 // pred_check_branch
    %17 = sbr.rel (0) target = $region17
  $region16: #{siamese_forward.1} parent=0 // pred_region
    _
  $region17: #{siamese_forward.1} parent=0 // pred_fallthru
    _
  // Predicated region
  $region18: #{siamese_forward.1} parent=0 // pred_check
    _
  $region19: #{siamese_forward.1} parent=0 // pred_check_branch
    %19 = sbr.rel (0) target = $region21
  $region20: #{siamese_forward.1} parent=0 // pred_region
    _
  $region21: #{siamese_forward.1} parent=0 // pred_fallthru
    _
  %v21 = vld [vmem:[%s0] sm:$0xff]
  %v22 = vld [vmem:[%s0 + $0x8] sm:$0xff]
  %v23 = vld [vmem:[%s1] sm:$0xf]
  %v24 = vld [vmem:[%s1 + $0x4] sm:$0xf]
  %v25 = vld [vmem:[%s1 + $0x8] sm:$0xf]
  %v26 = vld [vmem:[%s1 + $0xc] sm:$0xf]
  %v27 = vld [vmem:[%s1 + $0x10] sm:$0xf]
  %v28 = vld [vmem:[%s1 + $0x14] sm:$0xf]
  %v29 = vld [vmem:[%s1 + $0x18] sm:$0xf]
  %v30 = vld [vmem:[%s1 + $0x1c] sm:$0xf]
  %v31 = vld [vmem:[%s1 + $0x20] sm:$0xf]
  %v32 = vld [vmem:[%s1 + $0x24] sm:$0xf]
  %v33 = vld [vmem:[%s1 + $0x28] sm:$0xf]
  %v34 = vld [vmem:[%s1 + $0x2c] sm:$0xf]
  %v35 = vld [vmem:[%s1 + $0x30] sm:$0xf]
  %v36 = vld [vmem:[%s1 + $0x34] sm:$0xf]
  %v37 = vld [vmem:[%s1 + $0x38] sm:$0xf]
  %v38 = vld [vmem:[%s1 + $0x3c] sm:$0xf]
  %v39 = vld [vmem:[%s1 + $0x40] sm:$0xf]
  %v40 = vld [vmem:[%s1 + $0x44] sm:$0xf]
  %v41 = vld [vmem:[%s1 + $0x48] sm:$0xf]
  %v42 = vld [vmem:[%s1 + $0x4c] sm:$0xf]
  %v43 = vld [vmem:[%s1 + $0x50] sm:$0xf]
  %v44 = vld [vmem:[%s1 + $0x54] sm:$0xf]
  %v45 = vld [vmem:[%s1 + $0x58] sm:$0xf]
  %v46 = vld [vmem:[%s1 + $0x5c] sm:$0xf]
  %v47 = vld [vmem:[%s1 + $0x60] sm:$0xf]
  %v48 = vld [vmem:[%s1 + $0x64] sm:$0xf]
  %v49 = vld [vmem:[%s1 + $0x68] sm:$0xf]
  %v50 = vld [vmem:[%s1 + $0x6c] sm:$0xf]
  %v51 = vld [vmem:[%s1 + $0x70] sm:$0xf]
  %v52 = vld [vmem:[%s1 + $0x74] sm:$0xf]
  %v53 = vld [vmem:[%s1 + $0x78] sm:$0xf]
  %v54 = vld [vmem:[%s1 + $0x7c] sm:$0xf]
  %v55 = vld [vmem:[%s1 + $0x80] sm:$0xf]
  %v56 = vld [vmem:[%s1 + $0x84] sm:$0xf]
  %v57 = vld [vmem:[%s1 + $0x88] sm:$0xf]
  %v58 = vld [vmem:[%s1 + $0x8c] sm:$0xf]
  %v59 = vld [vmem:[%s1 + $0x90] sm:$0xf]
  %v60 = vld [vmem:[%s1 + $0x94] sm:$0xf]
  %v61 = vld [vmem:[%s1 + $0x98] sm:$0xf]
  %v62 = vld [vmem:[%s1 + $0x9c] sm:$0xf]
  %v63 = vld [vmem:[%s1 + $0xa0] sm:$0xf]
  %v64 = vld [vmem:[%s1 + $0xa4] sm:$0xf]
  %v65 = vld [vmem:[%s1 + $0xa8] sm:$0xf]
  %v66 = vld [vmem:[%s1 + $0xac] sm:$0xf]
  %v67 = vld [vmem:[%s1 + $0xb0] sm:$0xf]
  %v68 = vld [vmem:[%s1 + $0xb4] sm:$0xf]
  %v69 = vld [vmem:[%s1 + $0xb8] sm:$0xf]
  %v70 = vld [vmem:[%s1 + $0xbc] sm:$0xf]
  %v71 = vld [vmem:[%s1 + $0xc0] sm:$0xf]
  %v72 = vld [vmem:[%s1 + $0xc4] sm:$0xf]
  %v73 = vld [vmem:[%s1 + $0xc8] sm:$0xf]
  %v74 = vld [vmem:[%s1 + $0xcc] sm:$0xf]
  %v75 = vld [vmem:[%s1 + $0xd0] sm:$0xf]
  %v76 = vld [vmem:[%s1 + $0xd4] sm:$0xf]
  %v77 = vld [vmem:[%s1 + $0xd8] sm:$0xf]
  %v78 = vld [vmem:[%s1 + $0xdc] sm:$0xf]
  %v79 = vld [vmem:[%s1 + $0xe0] sm:$0xf]
  %v80 = vld [vmem:[%s1 + $0xe4] sm:$0xf]
  %v81 = vld [vmem:[%s1 + $0xe8] sm:$0xf]
  %v82 = vld [vmem:[%s1 + $0xec] sm:$0xf]
  %v83 = vld [vmem:[%s1 + $0xf0] sm:$0xf]
  %v84 = vld [vmem:[%s1 + $0xf4] sm:$0xf]
  %v85 = vld [vmem:[%s1 + $0xf8] sm:$0xf]
  %v86 = vld [vmem:[%s1 + $0xfc] sm:$0xf]
  %v87 = vld [vmem:[%s1 + $0x100] sm:$0xf]
  %v88 = vld [vmem:[%s1 + $0x104] sm:$0xf]
  %v89 = vld [vmem:[%s1 + $0x108] sm:$0xf]
  %v90 = vld [vmem:[%s1 + $0x10c] sm:$0xf]
  %v91 = vld [vmem:[%s1 + $0x110] sm:$0xf]
  %v92 = vld [vmem:[%s1 + $0x114] sm:$0xf]
  %v93 = vld [vmem:[%s1 + $0x118] sm:$0xf]
  %v94 = vld [vmem:[%s1 + $0x11c] sm:$0xf]
  %v95 = vld [vmem:[%s1 + $0x120] sm:$0xf]
  %v96 = vld [vmem:[%s1 + $0x124] sm:$0xf]
  %v97 = vld [vmem:[%s1 + $0x128] sm:$0xf]
  %v98 = vld [vmem:[%s1 + $0x12c] sm:$0xf]
  %v99 = vld [vmem:[%s1 + $0x130] sm:$0xf]
  %v100 = vld [vmem:[%s1 + $0x134] sm:$0xf]
  %v101 = vld [vmem:[%s1 + $0x138] sm:$0xf]
  %v102 = vld [vmem:[%s1 + $0x13c] sm:$0xf]
  %v103 = vld [vmem:[%s1 + $0x140] sm:$0xf]
  %v104 = vld [vmem:[%s1 + $0x144] sm:$0xf]
  %v105 = vld [vmem:[%s1 + $0x148] sm:$0xf]
  %v106 = vld [vmem:[%s1 + $0x14c] sm:$0xf]
  %v107 = vld [vmem:[%s1 + $0x150] sm:$0xf]
  %v108 = vld [vmem:[%s1 + $0x154] sm:$0xf]
  %v109 = vld [vmem:[%s1 + $0x158] sm:$0xf]
  %v110 = vld [vmem:[%s1 + $0x15c] sm:$0xf]
  %v111 = vld [vmem:[%s1 + $0x160] sm:$0xf]
  %v112 = vld [vmem:[%s1 + $0x164] sm:$0xf]
  %v113 = vld [vmem:[%s1 + $0x168] sm:$0xf]
  %v114 = vld [vmem:[%s1 + $0x16c] sm:$0xf]
  %v115 = vld [vmem:[%s1 + $0x170] sm:$0xf]
  %v116 = vld [vmem:[%s1 + $0x174] sm:$0xf]
  %v117 = vld [vmem:[%s1 + $0x178] sm:$0xf]
  %v118 = vld [vmem:[%s1 + $0x17c] sm:$0xf]
  %v119 = vld [vmem:[%s1 + $0x180] sm:$0xf]
  %v120 = vld [vmem:[%s1 + $0x184] sm:$0xf]
  %v121 = vld [vmem:[%s1 + $0x188] sm:$0xf]
  %v122 = vld [vmem:[%s1 + $0x18c] sm:$0xf]
  %v123 = vld [vmem:[%s1 + $0x190] sm:$0xf]
  %v124 = vld [vmem:[%s1 + $0x194] sm:$0xf]
  %v125 = vld [vmem:[%s1 + $0x198] sm:$0xf]
  %v126 = vld [vmem:[%s1 + $0x19c] sm:$0xf]
  %v127 = vld [vmem:[%s1 + $0x1a0] sm:$0xf]
  %v128 = vld [vmem:[%s1 + $0x1a4] sm:$0xf]
  %v129 = vld [vmem:[%s1 + $0x1a8] sm:$0xf]
  %v130 = vld [vmem:[%s1 + $0x1ac] sm:$0xf]
  %v131 = vld [vmem:[%s1 + $0x1b0] sm:$0xf]
  %v132 = vld [vmem:[%s1 + $0x1b4] sm:$0xf]
  %v133 = vld [vmem:[%s1 + $0x1b8] sm:$0xf]
  %v134 = vld [vmem:[%s1 + $0x1bc] sm:$0xf]
  %v135 = vld [vmem:[%s1 + $0x1c0] sm:$0xf]
  %v136 = vld [vmem:[%s1 + $0x1c4] sm:$0xf]
  %v137 = vld [vmem:[%s1 + $0x1c8] sm:$0xf]
  %v138 = vld [vmem:[%s1 + $0x1cc] sm:$0xf]
  %v139 = vld [vmem:[%s1 + $0x1d0] sm:$0xf]
  %v140 = vld [vmem:[%s1 + $0x1d4] sm:$0xf]
  %v141 = vld [vmem:[%s1 + $0x1d8] sm:$0xf]
  %v142 = vld [vmem:[%s1 + $0x1dc] sm:$0xf]
  %v143 = vld [vmem:[%s1 + $0x1e0] sm:$0xf]
  %v144 = vld [vmem:[%s1 + $0x1e4] sm:$0xf]
  %v145 = vld [vmem:[%s1 + $0x1e8] sm:$0xf]
  %v146 = vld [vmem:[%s1 + $0x1ec] sm:$0xf]
  %v147 = vld [vmem:[%s1 + $0x1f0] sm:$0xf]
  %v148 = vld [vmem:[%s1 + $0x1f4] sm:$0xf]
  %v149 = vld [vmem:[%s1 + $0x1f8] sm:$0xf]
  %v150 = vld [vmem:[%s1 + $0x1fc] sm:$0xf]
  %v151 = vld [vmem:[%s2] sm:$0x1]
  %v153 = vlaneseq
  %v154 = vshrl.u32 %v153, 7
  %v155 = vsub.s32 0, %v154
  %v156 = vrot.slane %v151, %v155
  %v160 = vcombine.high %v21, %v21
  %v162 = vunpack.c.l.s4 1983009808
  %v163 = vunpack.c.0.s8 %v162
  %v164 = vlaneseq
  %v165 = vshrl.u32 %v164, 7
  %v166 = vsub.s32 %v163, %v165
  %v167 = vrot.slane %v21, %v166
  %v169 = vunpack.c.l.s4 1983009808
  %v170 = vunpack.c.0.s8 %v169
  %v171 = vlaneseq
  %v172 = vshrl.u32 %v171, 7
  %v173 = vsub.s32 %v170, %v172
  %v174 = vrot.slane %v160, %v173
  %v175 = vcombine.high %v167, %v167
  %v176 = vcombine.high %v174, %v174
  %v177 = vcombine.high %v22, %v22
  %v179 = vunpack.c.l.s4 1983009808
  %v180 = vunpack.c.0.s8 %v179
  %v181 = vlaneseq
  %v182 = vshrl.u32 %v181, 7
  %v183 = vsub.s32 %v180, %v182
  %v184 = vrot.slane %v22, %v183
  %v186 = vunpack.c.l.s4 1983009808
  %v187 = vunpack.c.0.s8 %v186
  %v188 = vlaneseq
  %v189 = vshrl.u32 %v188, 7
  %v190 = vsub.s32 %v187, %v189
  %v191 = vrot.slane %v177, %v190
  %v192 = vcombine.high %v184, %v184
  %v193 = vcombine.high %v191, %v191
  %v330 = vunpack.c.l.b16 %v23
  %v331 = vunpack.c.l.b16 %v24
  %v332 = vunpack.c.l.b16 %v25
  %v333 = vunpack.c.l.b16 %v26
  %v334 = vunpack.c.l.b16 %v27
  %v335 = vunpack.c.l.b16 %v28
  %v336 = vunpack.c.l.b16 %v29
  %v337 = vunpack.c.l.b16 %v30
  %v338 = vunpack.c.l.b16 %v31
  %v339 = vunpack.c.l.b16 %v32
  %v340 = vunpack.c.l.b16 %v33
  %v341 = vunpack.c.l.b16 %v34
  %v342 = vunpack.c.l.b16 %v35
  %v343 = vunpack.c.l.b16 %v36
  %v344 = vunpack.c.l.b16 %v37
  %v345 = vunpack.c.l.b16 %v38
  %v346 = vunpack.c.l.b16 %v39
  %v347 = vunpack.c.l.b16 %v40
  %v348 = vunpack.c.l.b16 %v41
  %v349 = vunpack.c.l.b16 %v42
  %v350 = vunpack.c.l.b16 %v43
  %v351 = vunpack.c.l.b16 %v44
  %v352 = vunpack.c.l.b16 %v45
  %v353 = vunpack.c.l.b16 %v46
  %v354 = vunpack.c.l.b16 %v47
  %v355 = vunpack.c.l.b16 %v48
  %v356 = vunpack.c.l.b16 %v49
  %v357 = vunpack.c.l.b16 %v50
  %v358 = vunpack.c.l.b16 %v51
  %v359 = vunpack.c.l.b16 %v52
  %v360 = vunpack.c.l.b16 %v53
  %v361 = vunpack.c.l.b16 %v54
  %v362 = vunpack.c.l.b16 %v55
  %v363 = vunpack.c.l.b16 %v56
  %v364 = vunpack.c.l.b16 %v57
  %v365 = vunpack.c.l.b16 %v58
  %v366 = vunpack.c.l.b16 %v59
  %v367 = vunpack.c.l.b16 %v60
  %v368 = vunpack.c.l.b16 %v61
  %v369 = vunpack.c.l.b16 %v62
  %v370 = vunpack.c.l.b16 %v63
  %v371 = vunpack.c.l.b16 %v64
  %v372 = vunpack.c.l.b16 %v65
  %v373 = vunpack.c.l.b16 %v66
  %v374 = vunpack.c.l.b16 %v67
  %v375 = vunpack.c.l.b16 %v68
  %v376 = vunpack.c.l.b16 %v69
  %v377 = vunpack.c.l.b16 %v70
  %v378 = vunpack.c.l.b16 %v71
  %v379 = vunpack.c.l.b16 %v72
  %v380 = vunpack.c.l.b16 %v73
  %v381 = vunpack.c.l.b16 %v74
  %v382 = vunpack.c.l.b16 %v75
  %v383 = vunpack.c.l.b16 %v76
  %v384 = vunpack.c.l.b16 %v77
  %v385 = vunpack.c.l.b16 %v78
  %v386 = vunpack.c.l.b16 %v79
  %v387 = vunpack.c.l.b16 %v80
  %v388 = vunpack.c.l.b16 %v81
  %v389 = vunpack.c.l.b16 %v82
  %v390 = vunpack.c.l.b16 %v83
  %v391 = vunpack.c.l.b16 %v84
  %v392 = vunpack.c.l.b16 %v85
  %v393 = vunpack.c.l.b16 %v86
  %v394 = vunpack.c.l.b16 %v87
  %v395 = vunpack.c.l.b16 %v88
  %v396 = vunpack.c.l.b16 %v89
  %v397 = vunpack.c.l.b16 %v90
  %v398 = vunpack.c.l.b16 %v91
  %v399 = vunpack.c.l.b16 %v92
  %v400 = vunpack.c.l.b16 %v93
  %v401 = vunpack.c.l.b16 %v94
  %v402 = vunpack.c.l.b16 %v95
  %v403 = vunpack.c.l.b16 %v96
  %v404 = vunpack.c.l.b16 %v97
  %v405 = vunpack.c.l.b16 %v98
  %v406 = vunpack.c.l.b16 %v99
  %v407 = vunpack.c.l.b16 %v100
  %v408 = vunpack.c.l.b16 %v101
  %v409 = vunpack.c.l.b16 %v102
  %v410 = vunpack.c.l.b16 %v103
  %v411 = vunpack.c.l.b16 %v104
  %v412 = vunpack.c.l.b16 %v105
  %v413 = vunpack.c.l.b16 %v106
  %v414 = vunpack.c.l.b16 %v107
  %v415 = vunpack.c.l.b16 %v108
  %v416 = vunpack.c.l.b16 %v109
  %v417 = vunpack.c.l.b16 %v110
  %v418 = vunpack.c.l.b16 %v111
  %v419 = vunpack.c.l.b16 %v112
  %v420 = vunpack.c.l.b16 %v113
  %v421 = vunpack.c.l.b16 %v114
  %v422 = vunpack.c.l.b16 %v115
  %v423 = vunpack.c.l.b16 %v116
  %v424 = vunpack.c.l.b16 %v117
  %v425 = vunpack.c.l.b16 %v118
  %v426 = vunpack.c.l.b16 %v119
  %v427 = vunpack.c.l.b16 %v120
  %v428 = vunpack.c.l.b16 %v121
  %v429 = vunpack.c.l.b16 %v122
  %v430 = vunpack.c.l.b16 %v123
  %v431 = vunpack.c.l.b16 %v124
  %v432 = vunpack.c.l.b16 %v125
  %v433 = vunpack.c.l.b16 %v126
  %v434 = vunpack.c.l.b16 %v127
  %v435 = vunpack.c.l.b16 %v128
  %v436 = vunpack.c.l.b16 %v129
  %v437 = vunpack.c.l.b16 %v130
  %v438 = vunpack.c.l.b16 %v131
  %v439 = vunpack.c.l.b16 %v132
  %v440 = vunpack.c.l.b16 %v133
  %v441 = vunpack.c.l.b16 %v134
  %v442 = vunpack.c.l.b16 %v135
  %v443 = vunpack.c.l.b16 %v136
  %v444 = vunpack.c.l.b16 %v137
  %v445 = vunpack.c.l.b16 %v138
  %v446 = vunpack.c.l.b16 %v139
  %v447 = vunpack.c.l.b16 %v140
  %v448 = vunpack.c.l.b16 %v141
  %v449 = vunpack.c.l.b16 %v142
  %v450 = vunpack.c.l.b16 %v143
  %v451 = vunpack.c.l.b16 %v144
  %v452 = vunpack.c.l.b16 %v145
  %v453 = vunpack.c.l.b16 %v146
  %v454 = vunpack.c.l.b16 %v147
  %v455 = vunpack.c.l.b16 %v148
  %v456 = vunpack.c.l.b16 %v149
  %v457 = vunpack.c.l.b16 %v150
  %v458 = vpack.c.b16 %v331, %v330
  %v459 = vpack.c.b16 %v333, %v332
  %v460 = vpack.c.b16 %v335, %v334
  %v461 = vpack.c.b16 %v337, %v336
  %v462 = vpack.c.b16 %v339, %v338
  %v463 = vpack.c.b16 %v341, %v340
  %v464 = vpack.c.b16 %v343, %v342
  %v465 = vpack.c.b16 %v345, %v344
  %v466 = vpack.c.b16 %v347, %v346
  %v467 = vpack.c.b16 %v349, %v348
  %v468 = vpack.c.b16 %v351, %v350
  %v469 = vpack.c.b16 %v353, %v352
  %v470 = vpack.c.b16 %v355, %v354
  %v471 = vpack.c.b16 %v357, %v356
  %v472 = vpack.c.b16 %v359, %v358
  %v473 = vpack.c.b16 %v361, %v360
  %v474 = vpack.c.b16 %v363, %v362
  %v475 = vpack.c.b16 %v365, %v364
  %v476 = vpack.c.b16 %v367, %v366
  %v477 = vpack.c.b16 %v369, %v368
  %v478 = vpack.c.b16 %v371, %v370
  %v479 = vpack.c.b16 %v373, %v372
  %v480 = vpack.c.b16 %v375, %v374
  %v481 = vpack.c.b16 %v377, %v376
  %v482 = vpack.c.b16 %v379, %v378
  %v483 = vpack.c.b16 %v381, %v380
  %v484 = vpack.c.b16 %v383, %v382
  %v485 = vpack.c.b16 %v385, %v384
  %v486 = vpack.c.b16 %v387, %v386
  %v487 = vpack.c.b16 %v389, %v388
  %v488 = vpack.c.b16 %v391, %v390
  %v489 = vpack.c.b16 %v393, %v392
  %v490 = vpack.c.b16 %v395, %v394
  %v491 = vpack.c.b16 %v397, %v396
  %v492 = vpack.c.b16 %v399, %v398
  %v493 = vpack.c.b16 %v401, %v400
  %v494 = vpack.c.b16 %v403, %v402
  %v495 = vpack.c.b16 %v405, %v404
  %v496 = vpack.c.b16 %v407, %v406
  %v497 = vpack.c.b16 %v409, %v408
  %v498 = vpack.c.b16 %v411, %v410
  %v499 = vpack.c.b16 %v413, %v412
  %v500 = vpack.c.b16 %v415, %v414
  %v501 = vpack.c.b16 %v417, %v416
  %v502 = vpack.c.b16 %v419, %v418
  %v503 = vpack.c.b16 %v421, %v420
  %v504 = vpack.c.b16 %v423, %v422
  %v505 = vpack.c.b16 %v425, %v424
  %v506 = vpack.c.b16 %v427, %v426
  %v507 = vpack.c.b16 %v429, %v428
  %v508 = vpack.c.b16 %v431, %v430
  %v509 = vpack.c.b16 %v433, %v432
  %v510 = vpack.c.b16 %v435, %v434
  %v511 = vpack.c.b16 %v437, %v436
  %v512 = vpack.c.b16 %v439, %v438
  %v513 = vpack.c.b16 %v441, %v440
  %v514 = vpack.c.b16 %v443, %v442
  %v515 = vpack.c.b16 %v445, %v444
  %v516 = vpack.c.b16 %v447, %v446
  %v517 = vpack.c.b16 %v449, %v448
  %v518 = vpack.c.b16 %v451, %v450
  %v519 = vpack.c.b16 %v453, %v452
  %v520 = vpack.c.b16 %v455, %v454
  %v521 = vpack.c.b16 %v457, %v456
  %586 = vmatprep.subr.bf16.mxu0 0
  %587 = vmatpush1.bf16.msra.mxu0 %v458
  %588 = vmatprep.subr.bf16.mxu0 0
  %589 = vmatpush1.bf16.msra.mxu0 %v459
  %590 = vmatprep.subr.bf16.mxu0 0
  %591 = vmatpush1.bf16.msra.mxu0 %v460
  %592 = vmatprep.subr.bf16.mxu0 0
  %593 = vmatpush1.bf16.msra.mxu0 %v461
  %594 = vmatprep.subr.bf16.mxu0 0
  %595 = vmatpush1.bf16.msra.mxu0 %v462
  %596 = vmatprep.subr.bf16.mxu0 0
  %597 = vmatpush1.bf16.msra.mxu0 %v463
  %598 = vmatprep.subr.bf16.mxu0 0
  %599 = vmatpush1.bf16.msra.mxu0 %v464
  %600 = vmatprep.subr.bf16.mxu0 0
  %601 = vmatpush1.bf16.msra.mxu0 %v465
  %602 = vmatprep.subr.bf16.mxu0 0
  %603 = vmatpush1.bf16.msra.mxu0 %v466
  %604 = vmatprep.subr.bf16.mxu0 0
  %605 = vmatpush1.bf16.msra.mxu0 %v467
  %606 = vmatprep.subr.bf16.mxu0 0
  %607 = vmatpush1.bf16.msra.mxu0 %v468
  %608 = vmatprep.subr.bf16.mxu0 0
  %609 = vmatpush1.bf16.msra.mxu0 %v469
  %610 = vmatprep.subr.bf16.mxu0 0
  %611 = vmatpush1.bf16.msra.mxu0 %v470
  %612 = vmatprep.subr.bf16.mxu0 0
  %613 = vmatpush1.bf16.msra.mxu0 %v471
  %614 = vmatprep.subr.bf16.mxu0 0
  %615 = vmatpush1.bf16.msra.mxu0 %v472
  %616 = vmatprep.subr.bf16.mxu0 0
  %617 = vmatpush1.bf16.msra.mxu0 %v473
  %618 = vmatprep.mubr.bf16.mxu0 %v175
  %619 = vmatmul.mubr.bf16.gmra.mrb[0].mxu0 %v167
  %v620 = vpop.f32.mrb[0].mxu0
  %v621 = vadd.f32 %v156, %v620
  %v622 = vpop.f32.mrb[0].mxu0
  %v623 = vpop.f32.mrb[0].mxu0
  %v624 = vpop.f32.mrb[0].mxu0
  %625 = vdwg.mxu0
  %626 = vmatprep.subr.bf16.mxu0 0
  %627 = vmatpush1.bf16.msra.mxu0 %v474
  %628 = vmatprep.subr.bf16.mxu0 0
  %629 = vmatpush1.bf16.msra.mxu0 %v475
  %630 = vmatprep.subr.bf16.mxu0 0
  %631 = vmatpush1.bf16.msra.mxu0 %v476
  %632 = vmatprep.subr.bf16.mxu0 0
  %633 = vmatpush1.bf16.msra.mxu0 %v477
  %634 = vmatprep.subr.bf16.mxu0 0
  %635 = vmatpush1.bf16.msra.mxu0 %v478
  %636 = vmatprep.subr.bf16.mxu0 0
  %637 = vmatpush1.bf16.msra.mxu0 %v479
  %638 = vmatprep.subr.bf16.mxu0 0
  %639 = vmatpush1.bf16.msra.mxu0 %v480
  %640 = vmatprep.subr.bf16.mxu0 0
  %641 = vmatpush1.bf16.msra.mxu0 %v481
  %642 = vmatprep.subr.bf16.mxu0 0
  %643 = vmatpush1.bf16.msra.mxu0 %v482
  %644 = vmatprep.subr.bf16.mxu0 0
  %645 = vmatpush1.bf16.msra.mxu0 %v483
  %646 = vmatprep.subr.bf16.mxu0 0
  %647 = vmatpush1.bf16.msra.mxu0 %v484
  %648 = vmatprep.subr.bf16.mxu0 0
  %649 = vmatpush1.bf16.msra.mxu0 %v485
  %650 = vmatprep.subr.bf16.mxu0 0
  %651 = vmatpush1.bf16.msra.mxu0 %v486
  %652 = vmatprep.subr.bf16.mxu0 0
  %653 = vmatpush1.bf16.msra.mxu0 %v487
  %654 = vmatprep.subr.bf16.mxu0 0
  %655 = vmatpush1.bf16.msra.mxu0 %v488
  %656 = vmatprep.subr.bf16.mxu0 0
  %657 = vmatpush1.bf16.msra.mxu0 %v489
  %658 = vmatprep.mubr.bf16.mxu0 %v176
  %659 = vmatmul.mubr.bf16.gmra.mrb[0].mxu0 %v174
  %v660 = vpop.f32.mrb[0].mxu0
  %v661 = vadd.f32 %v621, %v660
  %v662 = vpop.f32.mrb[0].mxu0
  %v663 = vpop.f32.mrb[0].mxu0
  %v664 = vpop.f32.mrb[0].mxu0
  %665 = vdwg.mxu0
  %666 = vmatprep.subr.bf16.mxu0 0
  %667 = vmatpush1.bf16.msra.mxu0 %v490
  %668 = vmatprep.subr.bf16.mxu0 0
  %669 = vmatpush1.bf16.msra.mxu0 %v491
  %670 = vmatprep.subr.bf16.mxu0 0
  %671 = vmatpush1.bf16.msra.mxu0 %v492
  %672 = vmatprep.subr.bf16.mxu0 0
  %673 = vmatpush1.bf16.msra.mxu0 %v493
  %674 = vmatprep.subr.bf16.mxu0 0
  %675 = vmatpush1.bf16.msra.mxu0 %v494
  %676 = vmatprep.subr.bf16.mxu0 0
  %677 = vmatpush1.bf16.msra.mxu0 %v495
  %678 = vmatprep.subr.bf16.mxu0 0
  %679 = vmatpush1.bf16.msra.mxu0 %v496
  %680 = vmatprep.subr.bf16.mxu0 0
  %681 = vmatpush1.bf16.msra.mxu0 %v497
  %682 = vmatprep.subr.bf16.mxu0 0
  %683 = vmatpush1.bf16.msra.mxu0 %v498
  %684 = vmatprep.subr.bf16.mxu0 0
  %685 = vmatpush1.bf16.msra.mxu0 %v499
  %686 = vmatprep.subr.bf16.mxu0 0
  %687 = vmatpush1.bf16.msra.mxu0 %v500
  %688 = vmatprep.subr.bf16.mxu0 0
  %689 = vmatpush1.bf16.msra.mxu0 %v501
  %690 = vmatprep.subr.bf16.mxu0 0
  %691 = vmatpush1.bf16.msra.mxu0 %v502
  %692 = vmatprep.subr.bf16.mxu0 0
  %693 = vmatpush1.bf16.msra.mxu0 %v503
  %694 = vmatprep.subr.bf16.mxu0 0
  %695 = vmatpush1.bf16.msra.mxu0 %v504
  %696 = vmatprep.subr.bf16.mxu0 0
  %697 = vmatpush1.bf16.msra.mxu0 %v505
  %698 = vmatprep.mubr.bf16.mxu0 %v192
  %699 = vmatmul.mubr.bf16.gmra.mrb[0].mxu0 %v184
  %v700 = vpop.f32.mrb[0].mxu0
  %v701 = vadd.f32 %v661, %v700
  %v702 = vpop.f32.mrb[0].mxu0
  %v703 = vpop.f32.mrb[0].mxu0
  %v704 = vpop.f32.mrb[0].mxu0
  %705 = vdwg.mxu0
  %706 = vmatprep.subr.bf16.mxu0 0
  %707 = vmatpush1.bf16.msra.mxu0 %v506
  %708 = vmatprep.subr.bf16.mxu0 0
  %709 = vmatpush1.bf16.msra.mxu0 %v507
  %710 = vmatprep.subr.bf16.mxu0 0
  %711 = vmatpush1.bf16.msra.mxu0 %v508
  %712 = vmatprep.subr.bf16.mxu0 0
  %713 = vmatpush1.bf16.msra.mxu0 %v509
  %714 = vmatprep.subr.bf16.mxu0 0
  %715 = vmatpush1.bf16.msra.mxu0 %v510
  %716 = vmatprep.subr.bf16.mxu0 0
  %717 = vmatpush1.bf16.msra.mxu0 %v511
  %718 = vmatprep.subr.bf16.mxu0 0
  %719 = vmatpush1.bf16.msra.mxu0 %v512
  %720 = vmatprep.subr.bf16.mxu0 0
  %721 = vmatpush1.bf16.msra.mxu0 %v513
  %722 = vmatprep.subr.bf16.mxu0 0
  %723 = vmatpush1.bf16.msra.mxu0 %v514
  %724 = vmatprep.subr.bf16.mxu0 0
  %725 = vmatpush1.bf16.msra.mxu0 %v515
  %726 = vmatprep.subr.bf16.mxu0 0
  %727 = vmatpush1.bf16.msra.mxu0 %v516
  %728 = vmatprep.subr.bf16.mxu0 0
  %729 = vmatpush1.bf16.msra.mxu0 %v517
  %730 = vmatprep.subr.bf16.mxu0 0
  %731 = vmatpush1.bf16.msra.mxu0 %v518
  %732 = vmatprep.subr.bf16.mxu0 0
  %733 = vmatpush1.bf16.msra.mxu0 %v519
  %734 = vmatprep.subr.bf16.mxu0 0
  %735 = vmatpush1.bf16.msra.mxu0 %v520
  %736 = vmatprep.subr.bf16.mxu0 0
  %737 = vmatpush1.bf16.msra.mxu0 %v521
  %738 = vmatprep.mubr.bf16.mxu0 %v193
  %739 = vmatmul.mubr.bf16.gmra.mrb[0].mxu0 %v191
  %v740 = vpop.f32.mrb[0].mxu0
  %v741 = vadd.f32 %v701, %v740
  %v742 = vpop.f32.mrb[0].mxu0
  %v743 = vpop.f32.mrb[0].mxu0
  %v744 = vpop.f32.mrb[0].mxu0
  %745 = vdwg.mxu0
  %v746 = vmax.f32 %v741, 0.0
  %v747 = vpack.c.bf16 %v746, %v746
  %v748 = vld [vmem:[%s3] sm:$0xf]
  %v749 = vld [vmem:[%s3 + $0x4] sm:$0xf]
  %v750 = vld [vmem:[%s3 + $0x8] sm:$0xf]
  %v751 = vld [vmem:[%s3 + $0xc] sm:$0xf]
  %v752 = vld [vmem:[%s3 + $0x10] sm:$0xf]
  %v753 = vld [vmem:[%s3 + $0x14] sm:$0xf]
  %v754 = vld [vmem:[%s3 + $0x18] sm:$0xf]
  %v755 = vld [vmem:[%s3 + $0x1c] sm:$0xf]
  %v756 = vld [vmem:[%s4] sm:$0x1]
  %v758 = vlaneseq
  %v759 = vshrl.u32 %v758, 7
  %v760 = vsub.s32 0, %v759
  %v761 = vrot.slane %v756, %v760
  %v771 = vunpack.c.l.b16 %v748
  %v772 = vunpack.c.l.b16 %v749
  %v773 = vunpack.c.l.b16 %v750
  %v774 = vunpack.c.l.b16 %v751
  %v775 = vunpack.c.l.b16 %v752
  %v776 = vunpack.c.l.b16 %v753
  %v777 = vunpack.c.l.b16 %v754
  %v778 = vunpack.c.l.b16 %v755
  %v779 = vpack.c.b16 %v772, %v771
  %v780 = vpack.c.b16 %v774, %v773
  %v781 = vpack.c.b16 %v776, %v775
  %v782 = vpack.c.b16 %v778, %v777
  %vm787 = vcmask 523264
  %v789 = vsel %vm787, %v747, 0
  %791 = vmatprep.subr.bf16.mxu0 0
  %792 = vmatpush1.bf16.msra.mxu0 %v779
  %793 = vmatprep.subr.bf16.mxu0 0
  %794 = vmatpush1.bf16.msra.mxu0 %v780
  %795 = vmatprep.subr.bf16.mxu0 0
  %796 = vmatpush1.bf16.msra.mxu0 %v781
  %797 = vmatprep.subr.bf16.mxu0 0
  %798 = vmatpush1.bf16.msra.mxu0 %v782
  %799 = vmatprep.subr.bf16.mxu0 0
  %800 = vmatpush1.bf16.msra.mxu0 0
  %801 = vmatprep.subr.bf16.mxu0 0
  %802 = vmatpush1.bf16.msra.mxu0 0
  %803 = vmatprep.subr.bf16.mxu0 0
  %804 = vmatpush1.bf16.msra.mxu0 0
  %805 = vmatprep.subr.bf16.mxu0 0
  %806 = vmatpush1.bf16.msra.mxu0 0
  %807 = vmatprep.subr.bf16.mxu0 0
  %808 = vmatpush1.bf16.msra.mxu0 0
  %809 = vmatprep.subr.bf16.mxu0 0
  %810 = vmatpush1.bf16.msra.mxu0 0
  %811 = vmatprep.subr.bf16.mxu0 0
  %812 = vmatpush1.bf16.msra.mxu0 0
  %813 = vmatprep.subr.bf16.mxu0 0
  %814 = vmatpush1.bf16.msra.mxu0 0
  %815 = vmatprep.subr.bf16.mxu0 0
  %816 = vmatpush1.bf16.msra.mxu0 0
  %817 = vmatprep.subr.bf16.mxu0 0
  %818 = vmatpush1.bf16.msra.mxu0 0
  %819 = vmatprep.subr.bf16.mxu0 0
  %820 = vmatpush1.bf16.msra.mxu0 0
  %821 = vmatprep.subr.bf16.mxu0 0
  %822 = vmatpush1.bf16.msra.mxu0 0
  %823 = vmatprep.mubr.bf16.mxu0 0
  %824 = vmatmul.mubr.bf16.gmra.mrb[0].mxu0 %v789
  %v825 = vpop.f32.mrb[0].mxu0
  %v826 = vadd.f32 %v761, %v825
  %v827 = vpop.f32.mrb[0].mxu0
  %v828 = vpop.f32.mrb[0].mxu0
  %v829 = vpop.f32.mrb[0].mxu0
  %830 = vdwg.mxu0
  %831 = vst [vmem:[%s5] sm:$0xf] %v826
  // Predicated region
  $region22: #{siamese_forward.1} parent=0 // pred_check
    _
  $region23: #{siamese_forward.1} parent=0 // pred_check_branch
    %833 = sbr.rel (0) target = $region25
  $region24: #{siamese_forward.1} parent=0 // pred_region
    _
  $region25: #{siamese_forward.1} parent=0 // pred_fallthru
    _
  // Predicated region
  $region26: #{siamese_forward.1} parent=0 // pred_check
    _
  $region27: #{siamese_forward.1} parent=0 // pred_check_branch
    %835 = sbr.rel (0) target = $region29
  $region28: #{siamese_forward.1} parent=0 // pred_region
    _
  $region29: #{siamese_forward.1} parent=0 // pred_fallthru
    _

</llo_original>
